<compile_context>
chip_gen: v7x
topology: tpu7x:2x2x1
jax: 0.10.0
libtpu: 0.0.40
codegen_flags: <defaults>
</compile_context>

<pallas_src>
from functools import partial

import jax
import jax.numpy as jnp
from jax.experimental import pallas as pl
from jax.experimental.pallas import tpu as pltpu

_N = 2     # tokens per example
_D = 2     # linear1 in-features
_H1 = 3    # linear1 out-features
_H2 = 4    # linear2 out-features (see TODO above)
_LANE = 128


def _model_kernel(x_ref, w1_ref, b1_ref, w2_ref, b2_ref, out_ref):
    # x_ref : (N*D, TR, 128) VMEM — row n*D+d holds x[:, n, d] for this batch tile.
    # out_ref: (N*H2, TR, 128) VMEM — row n*H2+o holds out[:, n, o].
    # w1/b1/w2/b2 live in SMEM.

    # Hoist all 21 parameter scalars out of the unrolled loops (scalar-slot friendly).
    w1 = [[w1_ref[k, d] for d in range(_D)] for k in range(_H1)]
    b1 = [b1_ref[k] for k in range(_H1)]
    w2 = [[w2_ref[o, m] for m in range(_N)] for o in range(_H2)]
    b2 = [b2_ref[o] for o in range(_H2)]

    # Per-feature batch slabs, each (TR, 128) — full vregs, lane-dense.
    xr = [[x_ref[n * _D + d] for d in range(_D)] for n in range(_N)]

    # linear1: v1[n][k] = sum_d x[n,d] * w1[k,d] + b1[k]   (vectorized over batch)
    v1 = []
    for n in range(_N):
        row = []
        for k in range(_H1):
            acc = xr[n][0] * w1[k][0]
            for d in range(1, _D):
                acc = acc + xr[n][d] * w1[k][d]
            row.append(acc + b1[k])
        v1.append(row)

    # relu(permute(v1)) folded: ReLU is elementwise, so relu(v1^T) == relu(v1)^T
    # and the transpose disappears into the bmm contraction below.
    r1 = [[jnp.maximum(v1[m][k], 0.0) for k in range(_H1)] for m in range(_N)]

    # bmm: v4[n][m] = sum_k v1[n][k] * relu(v1[m][k])
    v4 = []
    for n in range(_N):
        row = []
        for m in range(_N):
            acc = v1[n][0] * r1[m][0]
            for k in range(1, _H1):
                acc = acc + v1[n][k] * r1[m][k]
            row.append(acc)
        v4.append(row)

    # linear2: out[n][o] = sum_m v4[n][m] * w2[o,m] + b2[o]
    for n in range(_N):
        for o in range(_H2):
            acc = v4[n][0] * w2[o][0]
            for m in range(1, _N):
                acc = acc + v4[n][m] * w2[o][m]
            out_ref[n * _H2 + o] = (acc + b2[o]).astype(out_ref.dtype)


@partial(jax.jit, static_argnames=("max_block_rows",))
def model_forward(x, w1, b1, w2, b2, *, max_block_rows=512):
    """x: (B, 2, 2) f32; w1: (3,2); b1: (3,); w2: (4,2); b2: (4,) -> (B, 2, 4)."""
    B, N, D = x.shape
    assert (N, D) == (_N, _D)
    H2 = w2.shape[0]

    # --- Adaptive batch tiling -------------------------------------------------
    rows = pl.cdiv(B, _LANE)                                   # 128-lane batch rows
    block_rows = min(max_block_rows, max(1, pl.cdiv(rows, 2)))  # keep grid >= 2
    num_blocks = pl.cdiv(rows, block_rows)
    if num_blocks > 1 and num_blocks % 2:
        num_blocks += 1        # even grid so v7x can shard across both TensorCores
    tile = block_rows * _LANE
    Bp = num_blocks * tile

    xp = jnp.pad(x, ((0, Bp - B), (0, 0), (0, 0))) if Bp != B else x
    rows_p = Bp // _LANE

    # Feature-major, lane-dense layout: (feature, batch/128, 128).
    # (Single fused transpose under jit; an integrated pipeline would feed this
    # layout directly and skip the conversion entirely.)
    x_fm = xp.reshape(Bp, N * D).T.reshape(N * D, rows_p, _LANE)

    # --- VMEM budget: double-buffered in + out tiles, plus headroom ------------
    working = 2 * (N * D + N * H2) * block_rows * _LANE * 4
    vmem_limit = int(min(48 << 20, max(16 << 20, 2 * working + (4 << 20))))

    smem_spec = pl.BlockSpec(memory_space=pltpu.MemorySpace.SMEM)

    out_fm = pl.pallas_call(
        _model_kernel,
        out_shape=jax.ShapeDtypeStruct((N * H2, rows_p, _LANE), x.dtype),
        grid=(num_blocks,),
        in_specs=[
            pl.BlockSpec((N * D, block_rows, _LANE), lambda b: (0, b, 0)),  # x tile
            smem_spec,   # w1 (3,2)
            smem_spec,   # b1 (3,)
            smem_spec,   # w2 (4,2)
            smem_spec,   # b2 (4,)
        ],
        out_specs=pl.BlockSpec((N * H2, block_rows, _LANE), lambda b: (0, b, 0)),
        compiler_params=pltpu.CompilerParams(
            dimension_semantics=("parallel",),
            vmem_limit_bytes=vmem_limit),
    )(x_fm, w1, b1, w2, b2)

    out = out_fm.reshape(N * H2, Bp).T.reshape(Bp, N, H2)
    return out[:B]


def _reference(x, w1, b1, w2, b2):
    # Pure-JAX mirror of the PyTorch forward for a correctness check.
    v1 = jnp.einsum("bnd,kd->bnk", x, w1) + b1[None, None, :]     # (B, 2, 3)
    v2 = jnp.transpose(v1, (0, 2, 1))                             # (B, 3, 2)
    v3 = jnp.maximum(v2, 0.0)
    v4 = jnp.einsum("bnk,bkm->bnm", v1, v3)                       # (B, 2, 2)
    return jnp.einsum("bnm,om->bno", v4, w2) + b2[None, None, :]  # (B, 2, 4)


if __name__ == "__main__":
    key = jax.random.PRNGKey(0)
    kx, k1, k2, k3, k4 = jax.random.split(key, 5)

    # Deterministic parameter init (PyTorch-style uniform(-1/sqrt(fan_in), ...)).
    bound1 = 1.0 / jnp.sqrt(jnp.float32(_D))
    bound2 = 1.0 / jnp.sqrt(jnp.float32(_N))   # fan_in of (adjusted) linear2 is 2
    w1 = jax.random.uniform(k1, (_H1, _D), jnp.float32, -bound1, bound1)
    b1 = jax.random.uniform(k2, (_H1,), jnp.float32, -bound1, bound1)
    w2 = jax.random.uniform(k3, (_H2, _N), jnp.float32, -bound2, bound2)
    b2 = jax.random.uniform(k4, (_H2,), jnp.float32, -bound2, bound2)

    # Batched input (same per-example shape (2, 2) as the torch.randn(1, 2, 2)
    # spec, batch enlarged so the kernel runs 2 batch tiles of 1024 rows each).
    B = 2048
    x = jax.random.normal(kx, (B, _N, _D), dtype=jnp.float32)

    out = model_forward(x, w1, b1, w2, b2)
    out = jax.block_until_ready(out)

    ref = _reference(x, w1, b1, w2, b2)
    assert out.shape == (B, _N, _H2)
    assert jnp.allclose(out, ref, atol=1e-5, rtol=1e-5)

    print("KERNEL_OK")
</pallas_src>

<mosaic_0001>
module attributes {stable_mosaic.version = 11 : i64} {
  func.func @_model_kernel(%arg0: i32, %arg1: memref<4x8x128xf32, #tpu.memory_space<vmem>>, %arg2: memref<3x2xf32, #tpu.memory_space<smem>>, %arg3: memref<3xf32, #tpu.memory_space<smem>>, %arg4: memref<4x2xf32, #tpu.memory_space<smem>>, %arg5: memref<4xf32, #tpu.memory_space<smem>>, %arg6: memref<8x8x128xf32, #tpu.memory_space<vmem>>) attributes {dimension_semantics = [#tpu.dimension_semantics<parallel>], iteration_bounds = array<i64: 2>, scalar_prefetch = 0 : i64, scratch_operands = 0 : i64, tpu.core_type = #tpu.core_type<tc>, window_params = [{transform_indices = @transform_0, window_bounds = array<i64: 4, 8, 128>}, {transform_indices = @transform_1, window_bounds = array<i64: 3, 2>}, {transform_indices = @transform_2, window_bounds = array<i64: 3>}, {transform_indices = @transform_3, window_bounds = array<i64: 4, 2>}, {transform_indices = @transform_4, window_bounds = array<i64: 4>}, {transform_indices = @transform_5, window_bounds = array<i64: 8, 8, 128>}]} {
    %c0 = arith.constant 0 : index
    %c0_0 = arith.constant 0 : index
    %0 = memref.load %arg2[%c0, %c0_0] : memref<3x2xf32, #tpu.memory_space<smem>>
    %c0_1 = arith.constant 0 : index
    %c1 = arith.constant 1 : index
    %1 = memref.load %arg2[%c0_1, %c1] : memref<3x2xf32, #tpu.memory_space<smem>>
    %c1_2 = arith.constant 1 : index
    %c0_3 = arith.constant 0 : index
    %2 = memref.load %arg2[%c1_2, %c0_3] : memref<3x2xf32, #tpu.memory_space<smem>>
    %c1_4 = arith.constant 1 : index
    %c1_5 = arith.constant 1 : index
    %3 = memref.load %arg2[%c1_4, %c1_5] : memref<3x2xf32, #tpu.memory_space<smem>>
    %c2 = arith.constant 2 : index
    %c0_6 = arith.constant 0 : index
    %4 = memref.load %arg2[%c2, %c0_6] : memref<3x2xf32, #tpu.memory_space<smem>>
    %c2_7 = arith.constant 2 : index
    %c1_8 = arith.constant 1 : index
    %5 = memref.load %arg2[%c2_7, %c1_8] : memref<3x2xf32, #tpu.memory_space<smem>>
    %c0_9 = arith.constant 0 : index
    %6 = memref.load %arg3[%c0_9] : memref<3xf32, #tpu.memory_space<smem>>
    %c1_10 = arith.constant 1 : index
    %7 = memref.load %arg3[%c1_10] : memref<3xf32, #tpu.memory_space<smem>>
    %c2_11 = arith.constant 2 : index
    %8 = memref.load %arg3[%c2_11] : memref<3xf32, #tpu.memory_space<smem>>
    %c0_12 = arith.constant 0 : index
    %c0_13 = arith.constant 0 : index
    %9 = memref.load %arg4[%c0_12, %c0_13] : memref<4x2xf32, #tpu.memory_space<smem>>
    %c0_14 = arith.constant 0 : index
    %c1_15 = arith.constant 1 : index
    %10 = memref.load %arg4[%c0_14, %c1_15] : memref<4x2xf32, #tpu.memory_space<smem>>
    %c1_16 = arith.constant 1 : index
    %c0_17 = arith.constant 0 : index
    %11 = memref.load %arg4[%c1_16, %c0_17] : memref<4x2xf32, #tpu.memory_space<smem>>
    %c1_18 = arith.constant 1 : index
    %c1_19 = arith.constant 1 : index
    %12 = memref.load %arg4[%c1_18, %c1_19] : memref<4x2xf32, #tpu.memory_space<smem>>
    %c2_20 = arith.constant 2 : index
    %c0_21 = arith.constant 0 : index
    %13 = memref.load %arg4[%c2_20, %c0_21] : memref<4x2xf32, #tpu.memory_space<smem>>
    %c2_22 = arith.constant 2 : index
    %c1_23 = arith.constant 1 : index
    %14 = memref.load %arg4[%c2_22, %c1_23] : memref<4x2xf32, #tpu.memory_space<smem>>
    %c3 = arith.constant 3 : index
    %c0_24 = arith.constant 0 : index
    %15 = memref.load %arg4[%c3, %c0_24] : memref<4x2xf32, #tpu.memory_space<smem>>
    %c3_25 = arith.constant 3 : index
    %c1_26 = arith.constant 1 : index
    %16 = memref.load %arg4[%c3_25, %c1_26] : memref<4x2xf32, #tpu.memory_space<smem>>
    %c0_27 = arith.constant 0 : index
    %17 = memref.load %arg5[%c0_27] : memref<4xf32, #tpu.memory_space<smem>>
    %c1_28 = arith.constant 1 : index
    %18 = memref.load %arg5[%c1_28] : memref<4xf32, #tpu.memory_space<smem>>
    %c2_29 = arith.constant 2 : index
    %19 = memref.load %arg5[%c2_29] : memref<4xf32, #tpu.memory_space<smem>>
    %c3_30 = arith.constant 3 : index
    %20 = memref.load %arg5[%c3_30] : memref<4xf32, #tpu.memory_space<smem>>
    %c0_31 = arith.constant 0 : index
    %c0_32 = arith.constant 0 : index
    %c0_33 = arith.constant 0 : index
    %21 = vector.load %arg1[%c0_31, %c0_32, %c0_33] : memref<4x8x128xf32, #tpu.memory_space<vmem>>, vector<1x8x128xf32>
    %22 = vector.shape_cast %21 : vector<1x8x128xf32> to vector<8x128xf32>
    %c1_34 = arith.constant 1 : index
    %c0_35 = arith.constant 0 : index
    %c0_36 = arith.constant 0 : index
    %23 = vector.load %arg1[%c1_34, %c0_35, %c0_36] : memref<4x8x128xf32, #tpu.memory_space<vmem>>, vector<1x8x128xf32>
    %24 = vector.shape_cast %23 : vector<1x8x128xf32> to vector<8x128xf32>
    %c2_37 = arith.constant 2 : index
    %c0_38 = arith.constant 0 : index
    %c0_39 = arith.constant 0 : index
    %25 = vector.load %arg1[%c2_37, %c0_38, %c0_39] : memref<4x8x128xf32, #tpu.memory_space<vmem>>, vector<1x8x128xf32>
    %26 = vector.shape_cast %25 : vector<1x8x128xf32> to vector<8x128xf32>
    %c3_40 = arith.constant 3 : index
    %c0_41 = arith.constant 0 : index
    %c0_42 = arith.constant 0 : index
    %27 = vector.load %arg1[%c3_40, %c0_41, %c0_42] : memref<4x8x128xf32, #tpu.memory_space<vmem>>, vector<1x8x128xf32>
    %28 = vector.shape_cast %27 : vector<1x8x128xf32> to vector<8x128xf32>
    %29 = vector.broadcast %0 : f32 to vector<8x128xf32>
    %30 = arith.mulf %22, %29 : vector<8x128xf32>
    %31 = vector.broadcast %1 : f32 to vector<8x128xf32>
    %32 = arith.mulf %24, %31 : vector<8x128xf32>
    %33 = arith.addf %30, %32 : vector<8x128xf32>
    %34 = vector.broadcast %6 : f32 to vector<8x128xf32>
    %35 = arith.addf %33, %34 : vector<8x128xf32>
    %36 = vector.broadcast %2 : f32 to vector<8x128xf32>
    %37 = arith.mulf %22, %36 : vector<8x128xf32>
    %38 = vector.broadcast %3 : f32 to vector<8x128xf32>
    %39 = arith.mulf %24, %38 : vector<8x128xf32>
    %40 = arith.addf %37, %39 : vector<8x128xf32>
    %41 = vector.broadcast %7 : f32 to vector<8x128xf32>
    %42 = arith.addf %40, %41 : vector<8x128xf32>
    %43 = vector.broadcast %4 : f32 to vector<8x128xf32>
    %44 = arith.mulf %22, %43 : vector<8x128xf32>
    %45 = vector.broadcast %5 : f32 to vector<8x128xf32>
    %46 = arith.mulf %24, %45 : vector<8x128xf32>
    %47 = arith.addf %44, %46 : vector<8x128xf32>
    %48 = vector.broadcast %8 : f32 to vector<8x128xf32>
    %49 = arith.addf %47, %48 : vector<8x128xf32>
    %50 = vector.broadcast %0 : f32 to vector<8x128xf32>
    %51 = arith.mulf %26, %50 : vector<8x128xf32>
    %52 = vector.broadcast %1 : f32 to vector<8x128xf32>
    %53 = arith.mulf %28, %52 : vector<8x128xf32>
    %54 = arith.addf %51, %53 : vector<8x128xf32>
    %55 = vector.broadcast %6 : f32 to vector<8x128xf32>
    %56 = arith.addf %54, %55 : vector<8x128xf32>
    %57 = vector.broadcast %2 : f32 to vector<8x128xf32>
    %58 = arith.mulf %26, %57 : vector<8x128xf32>
    %59 = vector.broadcast %3 : f32 to vector<8x128xf32>
    %60 = arith.mulf %28, %59 : vector<8x128xf32>
    %61 = arith.addf %58, %60 : vector<8x128xf32>
    %62 = vector.broadcast %7 : f32 to vector<8x128xf32>
    %63 = arith.addf %61, %62 : vector<8x128xf32>
    %64 = vector.broadcast %4 : f32 to vector<8x128xf32>
    %65 = arith.mulf %26, %64 : vector<8x128xf32>
    %66 = vector.broadcast %5 : f32 to vector<8x128xf32>
    %67 = arith.mulf %28, %66 : vector<8x128xf32>
    %68 = arith.addf %65, %67 : vector<8x128xf32>
    %69 = vector.broadcast %8 : f32 to vector<8x128xf32>
    %70 = arith.addf %68, %69 : vector<8x128xf32>
    %cst = arith.constant 0.000000e+00 : f32
    %71 = vector.broadcast %cst : f32 to vector<8x128xf32>
    %72 = arith.maximumf %35, %71 : vector<8x128xf32>
    %cst_43 = arith.constant 0.000000e+00 : f32
    %73 = vector.broadcast %cst_43 : f32 to vector<8x128xf32>
    %74 = arith.maximumf %42, %73 : vector<8x128xf32>
    %cst_44 = arith.constant 0.000000e+00 : f32
    %75 = vector.broadcast %cst_44 : f32 to vector<8x128xf32>
    %76 = arith.maximumf %49, %75 : vector<8x128xf32>
    %cst_45 = arith.constant 0.000000e+00 : f32
    %77 = vector.broadcast %cst_45 : f32 to vector<8x128xf32>
    %78 = arith.maximumf %56, %77 : vector<8x128xf32>
    %cst_46 = arith.constant 0.000000e+00 : f32
    %79 = vector.broadcast %cst_46 : f32 to vector<8x128xf32>
    %80 = arith.maximumf %63, %79 : vector<8x128xf32>
    %cst_47 = arith.constant 0.000000e+00 : f32
    %81 = vector.broadcast %cst_47 : f32 to vector<8x128xf32>
    %82 = arith.maximumf %70, %81 : vector<8x128xf32>
    %83 = arith.mulf %35, %72 : vector<8x128xf32>
    %84 = arith.mulf %42, %74 : vector<8x128xf32>
    %85 = arith.addf %83, %84 : vector<8x128xf32>
    %86 = arith.mulf %49, %76 : vector<8x128xf32>
    %87 = arith.addf %85, %86 : vector<8x128xf32>
    %88 = arith.mulf %35, %78 : vector<8x128xf32>
    %89 = arith.mulf %42, %80 : vector<8x128xf32>
    %90 = arith.addf %88, %89 : vector<8x128xf32>
    %91 = arith.mulf %49, %82 : vector<8x128xf32>
    %92 = arith.addf %90, %91 : vector<8x128xf32>
    %93 = arith.mulf %56, %72 : vector<8x128xf32>
    %94 = arith.mulf %63, %74 : vector<8x128xf32>
    %95 = arith.addf %93, %94 : vector<8x128xf32>
    %96 = arith.mulf %70, %76 : vector<8x128xf32>
    %97 = arith.addf %95, %96 : vector<8x128xf32>
    %98 = arith.mulf %56, %78 : vector<8x128xf32>
    %99 = arith.mulf %63, %80 : vector<8x128xf32>
    %100 = arith.addf %98, %99 : vector<8x128xf32>
    %101 = arith.mulf %70, %82 : vector<8x128xf32>
    %102 = arith.addf %100, %101 : vector<8x128xf32>
    %103 = vector.broadcast %9 : f32 to vector<8x128xf32>
    %104 = arith.mulf %87, %103 : vector<8x128xf32>
    %105 = vector.broadcast %10 : f32 to vector<8x128xf32>
    %106 = arith.mulf %92, %105 : vector<8x128xf32>
    %107 = arith.addf %104, %106 : vector<8x128xf32>
    %108 = vector.broadcast %17 : f32 to vector<8x128xf32>
    %109 = arith.addf %107, %108 : vector<8x128xf32>
    %c0_48 = arith.constant 0 : index
    %c0_49 = arith.constant 0 : index
    %c0_50 = arith.constant 0 : index
    %110 = vector.load %arg6[%c0_48, %c0_49, %c0_50] : memref<8x8x128xf32, #tpu.memory_space<vmem>>, vector<1x8x128xf32>
    %111 = vector.shape_cast %110 : vector<1x8x128xf32> to vector<8x128xf32>
    %112 = vector.shape_cast %109 : vector<8x128xf32> to vector<1x8x128xf32>
    tpu.vector_store %arg6[%c0_48, %c0_49, %c0_50], %112 {strides = array<i32>} : memref<8x8x128xf32, #tpu.memory_space<vmem>>, vector<1x8x128xf32>,
    %113 = vector.broadcast %11 : f32 to vector<8x128xf32>
    %114 = arith.mulf %87, %113 : vector<8x128xf32>
    %115 = vector.broadcast %12 : f32 to vector<8x128xf32>
    %116 = arith.mulf %92, %115 : vector<8x128xf32>
    %117 = arith.addf %114, %116 : vector<8x128xf32>
    %118 = vector.broadcast %18 : f32 to vector<8x128xf32>
    %119 = arith.addf %117, %118 : vector<8x128xf32>
    %c1_51 = arith.constant 1 : index
    %c0_52 = arith.constant 0 : index
    %c0_53 = arith.constant 0 : index
    %120 = vector.load %arg6[%c1_51, %c0_52, %c0_53] : memref<8x8x128xf32, #tpu.memory_space<vmem>>, vector<1x8x128xf32>
    %121 = vector.shape_cast %120 : vector<1x8x128xf32> to vector<8x128xf32>
    %122 = vector.shape_cast %119 : vector<8x128xf32> to vector<1x8x128xf32>
    tpu.vector_store %arg6[%c1_51, %c0_52, %c0_53], %122 {strides = array<i32>} : memref<8x8x128xf32, #tpu.memory_space<vmem>>, vector<1x8x128xf32>,
    %123 = vector.broadcast %13 : f32 to vector<8x128xf32>
    %124 = arith.mulf %87, %123 : vector<8x128xf32>
    %125 = vector.broadcast %14 : f32 to vector<8x128xf32>
    %126 = arith.mulf %92, %125 : vector<8x128xf32>
    %127 = arith.addf %124, %126 : vector<8x128xf32>
    %128 = vector.broadcast %19 : f32 to vector<8x128xf32>
    %129 = arith.addf %127, %128 : vector<8x128xf32>
    %c2_54 = arith.constant 2 : index
    %c0_55 = arith.constant 0 : index
    %c0_56 = arith.constant 0 : index
    %130 = vector.load %arg6[%c2_54, %c0_55, %c0_56] : memref<8x8x128xf32, #tpu.memory_space<vmem>>, vector<1x8x128xf32>
    %131 = vector.shape_cast %130 : vector<1x8x128xf32> to vector<8x128xf32>
    %132 = vector.shape_cast %129 : vector<8x128xf32> to vector<1x8x128xf32>
    tpu.vector_store %arg6[%c2_54, %c0_55, %c0_56], %132 {strides = array<i32>} : memref<8x8x128xf32, #tpu.memory_space<vmem>>, vector<1x8x128xf32>,
    %133 = vector.broadcast %15 : f32 to vector<8x128xf32>
    %134 = arith.mulf %87, %133 : vector<8x128xf32>
    %135 = vector.broadcast %16 : f32 to vector<8x128xf32>
    %136 = arith.mulf %92, %135 : vector<8x128xf32>
    %137 = arith.addf %134, %136 : vector<8x128xf32>
    %138 = vector.broadcast %20 : f32 to vector<8x128xf32>
    %139 = arith.addf %137, %138 : vector<8x128xf32>
    %c3_57 = arith.constant 3 : index
    %c0_58 = arith.constant 0 : index
    %c0_59 = arith.constant 0 : index
    %140 = vector.load %arg6[%c3_57, %c0_58, %c0_59] : memref<8x8x128xf32, #tpu.memory_space<vmem>>, vector<1x8x128xf32>
    %141 = vector.shape_cast %140 : vector<1x8x128xf32> to vector<8x128xf32>
    %142 = vector.shape_cast %139 : vector<8x128xf32> to vector<1x8x128xf32>
    tpu.vector_store %arg6[%c3_57, %c0_58, %c0_59], %142 {strides = array<i32>} : memref<8x8x128xf32, #tpu.memory_space<vmem>>, vector<1x8x128xf32>,
    %143 = vector.broadcast %9 : f32 to vector<8x128xf32>
    %144 = arith.mulf %97, %143 : vector<8x128xf32>
    %145 = vector.broadcast %10 : f32 to vector<8x128xf32>
    %146 = arith.mulf %102, %145 : vector<8x128xf32>
    %147 = arith.addf %144, %146 : vector<8x128xf32>
    %148 = vector.broadcast %17 : f32 to vector<8x128xf32>
    %149 = arith.addf %147, %148 : vector<8x128xf32>
    %c4 = arith.constant 4 : index
    %c0_60 = arith.constant 0 : index
    %c0_61 = arith.constant 0 : index
    %150 = vector.load %arg6[%c4, %c0_60, %c0_61] : memref<8x8x128xf32, #tpu.memory_space<vmem>>, vector<1x8x128xf32>
    %151 = vector.shape_cast %150 : vector<1x8x128xf32> to vector<8x128xf32>
    %152 = vector.shape_cast %149 : vector<8x128xf32> to vector<1x8x128xf32>
    tpu.vector_store %arg6[%c4, %c0_60, %c0_61], %152 {strides = array<i32>} : memref<8x8x128xf32, #tpu.memory_space<vmem>>, vector<1x8x128xf32>,
    %153 = vector.broadcast %11 : f32 to vector<8x128xf32>
    %154 = arith.mulf %97, %153 : vector<8x128xf32>
    %155 = vector.broadcast %12 : f32 to vector<8x128xf32>
    %156 = arith.mulf %102, %155 : vector<8x128xf32>
    %157 = arith.addf %154, %156 : vector<8x128xf32>
    %158 = vector.broadcast %18 : f32 to vector<8x128xf32>
    %159 = arith.addf %157, %158 : vector<8x128xf32>
    %c5 = arith.constant 5 : index
    %c0_62 = arith.constant 0 : index
    %c0_63 = arith.constant 0 : index
    %160 = vector.load %arg6[%c5, %c0_62, %c0_63] : memref<8x8x128xf32, #tpu.memory_space<vmem>>, vector<1x8x128xf32>
    %161 = vector.shape_cast %160 : vector<1x8x128xf32> to vector<8x128xf32>
    %162 = vector.shape_cast %159 : vector<8x128xf32> to vector<1x8x128xf32>
    tpu.vector_store %arg6[%c5, %c0_62, %c0_63], %162 {strides = array<i32>} : memref<8x8x128xf32, #tpu.memory_space<vmem>>, vector<1x8x128xf32>,
    %163 = vector.broadcast %13 : f32 to vector<8x128xf32>
    %164 = arith.mulf %97, %163 : vector<8x128xf32>
    %165 = vector.broadcast %14 : f32 to vector<8x128xf32>
    %166 = arith.mulf %102, %165 : vector<8x128xf32>
    %167 = arith.addf %164, %166 : vector<8x128xf32>
    %168 = vector.broadcast %19 : f32 to vector<8x128xf32>
    %169 = arith.addf %167, %168 : vector<8x128xf32>
    %c6 = arith.constant 6 : index
    %c0_64 = arith.constant 0 : index
    %c0_65 = arith.constant 0 : index
    %170 = vector.load %arg6[%c6, %c0_64, %c0_65] : memref<8x8x128xf32, #tpu.memory_space<vmem>>, vector<1x8x128xf32>
    %171 = vector.shape_cast %170 : vector<1x8x128xf32> to vector<8x128xf32>
    %172 = vector.shape_cast %169 : vector<8x128xf32> to vector<1x8x128xf32>
    tpu.vector_store %arg6[%c6, %c0_64, %c0_65], %172 {strides = array<i32>} : memref<8x8x128xf32, #tpu.memory_space<vmem>>, vector<1x8x128xf32>,
    %173 = vector.broadcast %15 : f32 to vector<8x128xf32>
    %174 = arith.mulf %97, %173 : vector<8x128xf32>
    %175 = vector.broadcast %16 : f32 to vector<8x128xf32>
    %176 = arith.mulf %102, %175 : vector<8x128xf32>
    %177 = arith.addf %174, %176 : vector<8x128xf32>
    %178 = vector.broadcast %20 : f32 to vector<8x128xf32>
    %179 = arith.addf %177, %178 : vector<8x128xf32>
    %c7 = arith.constant 7 : index
    %c0_66 = arith.constant 0 : index
    %c0_67 = arith.constant 0 : index
    %180 = vector.load %arg6[%c7, %c0_66, %c0_67] : memref<8x8x128xf32, #tpu.memory_space<vmem>>, vector<1x8x128xf32>
    %181 = vector.shape_cast %180 : vector<1x8x128xf32> to vector<8x128xf32>
    %182 = vector.shape_cast %179 : vector<8x128xf32> to vector<1x8x128xf32>
    tpu.vector_store %arg6[%c7, %c0_66, %c0_67], %182 {strides = array<i32>} : memref<8x8x128xf32, #tpu.memory_space<vmem>>, vector<1x8x128xf32>,
    return
  }
  func.func @transform_0(%arg0: i32) -> (i32, i32, i32) {
    %c0_i32 = arith.constant 0 : i32
    %c0_i32_0 = arith.constant 0 : i32
    %c0_i32_1 = arith.constant 0 : i32
    return %c0_i32, %arg0, %c0_i32_0 : i32, i32, i32
  }
  func.func @transform_1(%arg0: i32) -> (i32, i32) {
    %c0_i32 = arith.constant 0 : i32
    %c0_i32_0 = arith.constant 0 : i32
    %c0_i32_1 = arith.constant 0 : i32
    return %c0_i32, %c0_i32_0 : i32, i32
  }
  func.func @transform_2(%arg0: i32) -> i32 {
    %c0_i32 = arith.constant 0 : i32
    %c0_i32_0 = arith.constant 0 : i32
    return %c0_i32 : i32
  }
  func.func @transform_3(%arg0: i32) -> (i32, i32) {
    %c0_i32 = arith.constant 0 : i32
    %c0_i32_0 = arith.constant 0 : i32
    %c0_i32_1 = arith.constant 0 : i32
    return %c0_i32, %c0_i32_0 : i32, i32
  }
  func.func @transform_4(%arg0: i32) -> i32 {
    %c0_i32 = arith.constant 0 : i32
    %c0_i32_0 = arith.constant 0 : i32
    return %c0_i32 : i32
  }
  func.func @transform_5(%arg0: i32) -> (i32, i32, i32) {
    %c0_i32 = arith.constant 0 : i32
    %c0_i32_0 = arith.constant 0 : i32
    %c0_i32_1 = arith.constant 0 : i32
    return %c0_i32, %arg0, %c0_i32_0 : i32, i32, i32
  }
}

</mosaic_0001>

<llo_original>
// kernel: model_forward.1
$region0: #{model_forward.1}
  #allocation0 [shape = 'u32[]', space=smem, size = 0x4, offset = 0x4, fixed_abs, tag = 'smem constant byte address 0x4 - core index']
  #allocation1 [shape = 'u32[144,128]{1,0:T(1,128)}', space=vmem, size = 0x12000, scoped, tag = 'internal scratch']
  %s0 = inlined_call_operand.vmem [shape: f32[4,16,128], index: 0, kind: input, shape index: {}]
  %s1 = inlined_call_operand.vmem [shape: f32[3,2], index: 1, kind: input, shape index: {}]
  %s2 = inlined_call_operand.vmem [shape: f32[3], index: 2, kind: input, shape index: {}]
  %s3 = inlined_call_operand.vmem [shape: f32[4,2], index: 3, kind: input, shape index: {}]
  %s4 = inlined_call_operand.vmem [shape: f32[4], index: 4, kind: input, shape index: {}]
  %s5 = inlined_call_operand.vmem [shape: f32[8,16,128], index: 5, kind: output, shape index: {}]
  %s6 = sld [smem:[#allocation0]]
  $region141: #{model_forward.1} parent=0
    _
  %s8 = ssub.s32 1, %s6
  %s9 = scalar_select 0, %s8, %s6
  $region1: #{model_forward.1} parent=0
    #allocation2 [shape = 'u8[32768]{0}', space=vmem, size = 0x8000, scoped, tag = 'input window, operand 0']
    #allocation3 [shape = 'u8[2048]{0}', space=smem, size = 0x800, scoped, tag = 'input window, operand 1, single buffered']
    #allocation4 [shape = 's32[2]{0}', space=sflag, size = 0x8, scoped, tag = 'scoped memory for model_forward.1']
    #allocation5 [shape = 'u8[512]{0}', space=smem, size = 0x200, scoped, tag = 'input window, operand 2, single buffered']
    #allocation6 [shape = 's32[1]{0}', space=sflag, size = 0x4, scoped, tag = 'scoped memory for model_forward.1']
    #allocation7 [shape = 'u8[2048]{0}', space=smem, size = 0x800, scoped, tag = 'input window, operand 3, single buffered']
    #allocation8 [shape = 'u8[512]{0}', space=smem, size = 0x200, scoped, tag = 'input window, operand 4, single buffered']
    #allocation9 [shape = 's32[1]{0}', space=sflag, size = 0x4, scoped, tag = 'scoped memory for model_forward.1']
    #allocation10 [shape = 'u8[65536]{0}', space=vmem, size = 0x10000, scoped, tag = 'output window, operand 0']
    %10 = vsyncpa [#allocation4], 0
    %11 = vsyncpa [#allocation6], 0
    %12 = vsyncpa [#allocation9], 0
    loop: start=0, step=1, limit=4
    $region2: #{model_forward.1} parent=1 // loop_pre_header
      _
    $region3: #{model_forward.1} parent=1 // loop_header
      %s14 = sphi 0, %s18
      %p15 = scmp.ge.s32.totalorder %s14, 4
      %s24 = sphi 0, %s26
      %s27 = sphi 0, %s24
      %s28 = sphi 0, %s27
      %s44 = sphi 0, %s28
      %s48 = sphi 0, %s48
      %s50 = sphi 0, %s48
      %s51 = sphi 0, %s50
      %s65 = sphi 0, %s51
      %s69 = sphi 0, %s69
      %s71 = sphi 0, %s69
      %s72 = sphi 0, %s71
      %s86 = sphi 0, %s72
      %s90 = sphi 0, %s90
      %s92 = sphi 0, %s90
      %s93 = sphi 0, %s92
      %s107 = sphi 0, %s93
      %s111 = sphi 0, %s111
      %s113 = sphi 0, %s111
      %s114 = sphi 0, %s113
      %s128 = sphi 0, %s114
      %s134 = sphi 0, %s136
      %s137 = sphi 0, %s134
      %s138 = sphi 0, %s137
      %s154 = sphi 0, %s138
    $region4: #{model_forward.1} parent=1 // loop_header_branch
      %17 = sbr.rel (%p15) target = $region8
    $region5: #{model_forward.1} parent=1 // loop_body
      %s19 = ssub.s32 %s14, 1
      %s20 = ssub.s32 %s14, 2
      %s21 = sadd.s32 %s14, 1
      %s22 = ssub.s32 %s14, %s21
      %p23 = scmp.eq.s32.totalorder %s22, 0
      %s25 = sadd.s32 %s24, 1
      %s26 = scalar_select %p23, %s24, %s25
      %p29 = pneg %p23
      %p30 = scmp.eq.s32.totalorder %s14, 1
      %p31 = por %p29, %p30
      %p32 = scmp.ne.s32.totalorder %s24, %s27
      %p33 = scmp.eq.s32.totalorder %s14, 0
      %p34 = por %p32, %p33
      %p35 = scmp.ne.s32.totalorder %s24, %s27
      %p36 = scmp.eq.s32.totalorder %s19, 1
      %p37 = por %p35, %p36
      %p38 = scmp.ne.s32.totalorder %s27, %s28
      %p39 = scmp.eq.s32.totalorder %s19, 0
      %p40 = por %p38, %p39
      %p41 = scmp.ne.s32.totalorder %s27, %s28
      %p42 = scmp.eq.s32.totalorder %s20, 1
      %p43 = por %p41, %p42
      %p45 = scmp.ne.s32.totalorder %s28, %s44
      %p46 = scmp.eq.s32.totalorder %s20, 0
      %p47 = por %p45, %p46
      %s49 = sadd.s32 %s48, 1
      %p52 = scmp.eq.s32.totalorder %s14, 1
      %p53 = scmp.ne.s32.totalorder %s48, %s50
      %p54 = scmp.eq.s32.totalorder %s14, 0
      %p55 = por %p53, %p54
      %p56 = scmp.ne.s32.totalorder %s48, %s50
      %p57 = scmp.eq.s32.totalorder %s19, 1
      %p58 = por %p56, %p57
      %p59 = scmp.ne.s32.totalorder %s50, %s51
      %p60 = scmp.eq.s32.totalorder %s19, 0
      %p61 = por %p59, %p60
      %p62 = scmp.ne.s32.totalorder %s50, %s51
      %p63 = scmp.eq.s32.totalorder %s20, 1
      %p64 = por %p62, %p63
      %p66 = scmp.ne.s32.totalorder %s51, %s65
      %p67 = scmp.eq.s32.totalorder %s20, 0
      %p68 = por %p66, %p67
      %s70 = sadd.s32 %s69, 1
      %p73 = scmp.eq.s32.totalorder %s14, 1
      %p74 = scmp.ne.s32.totalorder %s69, %s71
      %p75 = scmp.eq.s32.totalorder %s14, 0
      %p76 = por %p74, %p75
      %p77 = scmp.ne.s32.totalorder %s69, %s71
      %p78 = scmp.eq.s32.totalorder %s19, 1
      %p79 = por %p77, %p78
      %p80 = scmp.ne.s32.totalorder %s71, %s72
      %p81 = scmp.eq.s32.totalorder %s19, 0
      %p82 = por %p80, %p81
      %p83 = scmp.ne.s32.totalorder %s71, %s72
      %p84 = scmp.eq.s32.totalorder %s20, 1
      %p85 = por %p83, %p84
      %p87 = scmp.ne.s32.totalorder %s72, %s86
      %p88 = scmp.eq.s32.totalorder %s20, 0
      %p89 = por %p87, %p88
      %s91 = sadd.s32 %s90, 1
      %p94 = scmp.eq.s32.totalorder %s14, 1
      %p95 = scmp.ne.s32.totalorder %s90, %s92
      %p96 = scmp.eq.s32.totalorder %s14, 0
      %p97 = por %p95, %p96
      %p98 = scmp.ne.s32.totalorder %s90, %s92
      %p99 = scmp.eq.s32.totalorder %s19, 1
      %p100 = por %p98, %p99
      %p101 = scmp.ne.s32.totalorder %s92, %s93
      %p102 = scmp.eq.s32.totalorder %s19, 0
      %p103 = por %p101, %p102
      %p104 = scmp.ne.s32.totalorder %s92, %s93
      %p105 = scmp.eq.s32.totalorder %s20, 1
      %p106 = por %p104, %p105
      %p108 = scmp.ne.s32.totalorder %s93, %s107
      %p109 = scmp.eq.s32.totalorder %s20, 0
      %p110 = por %p108, %p109
      %s112 = sadd.s32 %s111, 1
      %p115 = scmp.eq.s32.totalorder %s14, 1
      %p116 = scmp.ne.s32.totalorder %s111, %s113
      %p117 = scmp.eq.s32.totalorder %s14, 0
      %p118 = por %p116, %p117
      %p119 = scmp.ne.s32.totalorder %s111, %s113
      %p120 = scmp.eq.s32.totalorder %s19, 1
      %p121 = por %p119, %p120
      %p122 = scmp.ne.s32.totalorder %s113, %s114
      %p123 = scmp.eq.s32.totalorder %s19, 0
      %p124 = por %p122, %p123
      %p125 = scmp.ne.s32.totalorder %s113, %s114
      %p126 = scmp.eq.s32.totalorder %s20, 1
      %p127 = por %p125, %p126
      %p129 = scmp.ne.s32.totalorder %s114, %s128
      %p130 = scmp.eq.s32.totalorder %s20, 0
      %p131 = por %p129, %p130
      %s132 = ssub.s32 %s14, %s21
      %p133 = scmp.eq.s32.totalorder %s132, 0
      %s135 = sadd.s32 %s134, 1
      %s136 = scalar_select %p133, %s134, %s135
      %p139 = pneg %p133
      %p140 = scmp.eq.s32.totalorder %s14, 1
      %p141 = por %p139, %p140
      %p142 = scmp.ne.s32.totalorder %s134, %s137
      %p143 = scmp.eq.s32.totalorder %s14, 0
      %p144 = por %p142, %p143
      %p145 = scmp.ne.s32.totalorder %s134, %s137
      %p146 = scmp.eq.s32.totalorder %s19, 1
      %p147 = por %p145, %p146
      %p148 = scmp.ne.s32.totalorder %s137, %s138
      %p149 = scmp.eq.s32.totalorder %s19, 0
      %p150 = por %p148, %p149
      %p151 = scmp.ne.s32.totalorder %s137, %s138
      %p152 = scmp.eq.s32.totalorder %s20, 1
      %p153 = por %p151, %p152
      %p155 = scmp.ne.s32.totalorder %s138, %s154
      %p156 = scmp.eq.s32.totalorder %s20, 0
      %p157 = por %p155, %p156
      %p158 = scmp.le.s32.totalorder 1, %s14
      %p159 = scmp.lt.s32.totalorder %s14, 3
      %p160 = pnand %p158, %p159
      %p161 = pneg %p160
      // Predicated region
      $region9: #{model_forward.1} parent=5 // pred_check
        _
      $region10: #{model_forward.1} parent=5 // pred_check_branch
        %163 = sbr.rel (%p160) target = $region12
      $region11: #{model_forward.1} parent=5 // pred_region
        %s164 = ssub.s32 %s14, 1
        // Predicated region
        $region13: #{model_forward.1} parent=11 // pred_check
          %p165 = pneg %p61
        $region14: #{model_forward.1} parent=11 // pred_check_branch
          %167 = sbr.rel (%p165) target = $region16
        $region15: #{model_forward.1} parent=11 // pred_region
          %s169 = ssub.s32 64, 64
          %170 = vsyncadd [#allocation4], %s169
          %s172 = sshll.u32 %s1, 4
          %s173 = int_to_ptr.vmem [resolvable:$true] %s172
          %175 = dma.vmem_to_smem %s173, 64, [#allocation3], [#allocation4]
        $region16: #{model_forward.1} parent=11 // pred_fallthru
          _
        // Predicated region
        $region17: #{model_forward.1} parent=11 // pred_check
          %p176 = pneg %p82
        $region18: #{model_forward.1} parent=11 // pred_check_branch
          %178 = sbr.rel (%p176) target = $region20
        $region19: #{model_forward.1} parent=11 // pred_region
          %s180 = ssub.s32 16, 16
          %181 = vsyncadd [#allocation6], %s180
          %s183 = sshll.u32 %s2, 4
          %s184 = int_to_ptr.vmem [resolvable:$true] %s183
          %186 = dma.vmem_to_smem %s184, 16, [#allocation5], [#allocation6]
        $region20: #{model_forward.1} parent=11 // pred_fallthru
          _
        // Predicated region
        $region21: #{model_forward.1} parent=11 // pred_check
          %p187 = pneg %p103
        $region22: #{model_forward.1} parent=11 // pred_check_branch
          %189 = sbr.rel (%p187) target = $region24
        $region23: #{model_forward.1} parent=11 // pred_region
          %s191 = ssub.s32 64, 64
          %192 = vsyncadd [#allocation6], %s191
          %s194 = sshll.u32 %s3, 4
          %s195 = int_to_ptr.vmem [resolvable:$true] %s194
          %197 = dma.vmem_to_smem %s195, 64, [#allocation7], [#allocation6]
        $region24: #{model_forward.1} parent=11 // pred_fallthru
          _
        // Predicated region
        $region25: #{model_forward.1} parent=11 // pred_check
          %p198 = pneg %p124
        $region26: #{model_forward.1} parent=11 // pred_check_branch
          %200 = sbr.rel (%p198) target = $region28
        $region27: #{model_forward.1} parent=11 // pred_region
          %s202 = ssub.s32 16, 16
          %203 = vsyncadd [#allocation9], %s202
          %s205 = sshll.u32 %s4, 4
          %s206 = int_to_ptr.vmem [resolvable:$true] %s205
          %208 = dma.vmem_to_smem %s206, 16, [#allocation8], [#allocation9]
        $region28: #{model_forward.1} parent=11 // pred_fallthru
          _
      $region12: #{model_forward.1} parent=5 // pred_fallthru
        _
      %p209 = scmp.lt.s32.totalorder %s14, 2
      // Predicated region
      $region29: #{model_forward.1} parent=5 // pred_check
        %p210 = pneg %p209
      $region30: #{model_forward.1} parent=5 // pred_check_branch
        %212 = sbr.rel (%p210) target = $region32
      $region31: #{model_forward.1} parent=5 // pred_region
        // Predicated region
        $region33: #{model_forward.1} parent=31 // pred_check
          %p213 = pneg %p34
        $region34: #{model_forward.1} parent=31 // pred_check_branch
          %215 = sbr.rel (%p213) target = $region36
        $region35: #{model_forward.1} parent=31 // pred_region
          %s216 = sand.u32 %s24, 1
          %s217 = sand.u32 %s24, 1
          %s218 = smul.addr %s217, 32
          %s219 = scalar_lea.vmem [#allocation2], %s218
          %s220 = smul.addr %s14, 8
          %s221 = scalar_lea.vmem %s0, %s220
          // Predicated region
          $region37: #{model_forward.1} parent=35 // pred_check
            _
          $region38: #{model_forward.1} parent=35 // pred_check_branch
            %223 = sbr.rel (0) target = $region40
          $region39: #{model_forward.1} parent=35 // pred_region
            // Predicated region
            $region41: #{model_forward.1} parent=39 // pred_check
              _
            $region42: #{model_forward.1} parent=39 // pred_check_branch
              %225 = sbr.rel (0) target = $region44
            $region43: #{model_forward.1} parent=39 // pred_region
              // Predicated region
              $region56: #{model_forward.1} parent=43 // pred_check
                _
              $region57: #{model_forward.1} parent=43 // pred_check_branch
                %246 = sbr.rel (0) target = $region59
              $region58: #{model_forward.1} parent=43 // pred_region
                loop: start=0, step=1, limit=1
                $region60: #{model_forward.1} parent=58 // loop_pre_header
                  _
                $region61: #{model_forward.1} parent=58 // loop_header
                  %s248 = sphi 0, %s252
                  %p249 = scmp.ge.s32.totalorder %s248, 1
                  %s253 = sphi %s221, %s221
                  %s254 = sphi %s219, %s219
                $region62: #{model_forward.1} parent=58 // loop_header_branch
                  %251 = sbr.rel (%p249) target = $region66
                $region63: #{model_forward.1} parent=58 // loop_body
                  %v255 = vld [vmem:[%s253] sm:$0xff]
                  %256 = vst [vmem:[%s254] sm:$0xff] %v255
                  %v257 = vld [vmem:[%s253 + $0x10] sm:$0xff]
                  %258 = vst [vmem:[%s254 + $0x8] sm:$0xff] %v257
                  %v259 = vld [vmem:[%s253 + $0x20] sm:$0xff]
                  %260 = vst [vmem:[%s254 + $0x10] sm:$0xff] %v259
                  %v261 = vld [vmem:[%s253 + $0x30] sm:$0xff]
                  %262 = vst [vmem:[%s254 + $0x18] sm:$0xff] %v261
                $region64: #{model_forward.1} parent=58 // loop_footer
                  %s252 = sadd.s32 1, %s248
                $region65: #{model_forward.1} parent=58 // loop_footer_branch
                  %247 = sbr.rel target = $region61
                $region66: #{model_forward.1} parent=58 // loop_exit
                  _
              $region59: #{model_forward.1} parent=43 // pred_fallthru
                _
              // Predicated region
              $region67: #{model_forward.1} parent=43 // pred_check
                _
              $region68: #{model_forward.1} parent=43 // pred_check_branch
                %264 = sbr.rel target = $region70
              $region69: #{model_forward.1} parent=43 // pred_region
                _
              $region70: #{model_forward.1} parent=43 // pred_fallthru
                _
            $region44: #{model_forward.1} parent=39 // pred_fallthru
              _
            // Predicated region
            $region45: #{model_forward.1} parent=39 // pred_check
              _
            $region46: #{model_forward.1} parent=39 // pred_check_branch
              %227 = sbr.rel target = $region48
            $region47: #{model_forward.1} parent=39 // pred_region
              loop: start=0, step=1, limit=1
              $region49: #{model_forward.1} parent=47 // loop_pre_header
                _
              $region50: #{model_forward.1} parent=47 // loop_header
                %s230 = sphi 0, %s234
                %p231 = scmp.ge.s32.totalorder %s230, 1
                %s235 = sphi %s221, %s221
                %s236 = sphi %s219, %s219
              $region51: #{model_forward.1} parent=47 // loop_header_branch
                %233 = sbr.rel (%p231) target = $region55
              $region52: #{model_forward.1} parent=47 // loop_body
                %v237 = vld [vmem:[%s235] sm:$0xff]
                %238 = vst [vmem:[%s236] sm:$0xff] %v237
                %v239 = vld [vmem:[%s235 + $0x10] sm:$0xff]
                %240 = vst [vmem:[%s236 + $0x8] sm:$0xff] %v239
                %v241 = vld [vmem:[%s235 + $0x20] sm:$0xff]
                %242 = vst [vmem:[%s236 + $0x10] sm:$0xff] %v241
                %v243 = vld [vmem:[%s235 + $0x30] sm:$0xff]
                %244 = vst [vmem:[%s236 + $0x18] sm:$0xff] %v243
              $region53: #{model_forward.1} parent=47 // loop_footer
                %s234 = sadd.s32 1, %s230
              $region54: #{model_forward.1} parent=47 // loop_footer_branch
                %229 = sbr.rel target = $region50
              $region55: #{model_forward.1} parent=47 // loop_exit
                _
            $region48: #{model_forward.1} parent=39 // pred_fallthru
              _
          $region40: #{model_forward.1} parent=35 // pred_fallthru
            _
          %265 = vnop
        $region36: #{model_forward.1} parent=31 // pred_fallthru
          _
      $region32: #{model_forward.1} parent=5 // pred_fallthru
        _
      %p266 = scmp.le.s32.totalorder 1, %s14
      %p267 = scmp.lt.s32.totalorder %s14, 3
      %p268 = pnand %p266, %p267
      %p269 = pneg %p268
      // Predicated region
      $region71: #{model_forward.1} parent=5 // pred_check
        _
      $region72: #{model_forward.1} parent=5 // pred_check_branch
        %271 = sbr.rel (%p268) target = $region74
      $region73: #{model_forward.1} parent=5 // pred_region
        %s272 = ssub.s32 %s14, 1
        %s273 = sand.u32 %s27, 1
        %s274 = sand.u32 %s27, 1
        %s275 = smul.addr %s274, 32
        %s276 = scalar_lea.vmem [#allocation2], %s275
        // Predicated region
        $region75: #{model_forward.1} parent=73 // pred_check
          %p277 = pneg %p40
        $region76: #{model_forward.1} parent=73 // pred_check_branch
          %279 = sbr.rel (%p277) target = $region78
        $region77: #{model_forward.1} parent=73 // pred_region
          _
        $region78: #{model_forward.1} parent=73 // pred_fallthru
          _
        // Predicated region
        $region79: #{model_forward.1} parent=73 // pred_check
          %p280 = pneg %p61
        $region80: #{model_forward.1} parent=73 // pred_check_branch
          %282 = sbr.rel (%p280) target = $region82
        $region81: #{model_forward.1} parent=73 // pred_region
          %283 = dma.done [#allocation4], 64
        $region82: #{model_forward.1} parent=73 // pred_fallthru
          _
        // Predicated region
        $region83: #{model_forward.1} parent=73 // pred_check
          %p284 = pneg %p82
        $region84: #{model_forward.1} parent=73 // pred_check_branch
          %286 = sbr.rel (%p284) target = $region86
        $region85: #{model_forward.1} parent=73 // pred_region
          %287 = dma.done [#allocation6], 16
        $region86: #{model_forward.1} parent=73 // pred_fallthru
          _
        // Predicated region
        $region87: #{model_forward.1} parent=73 // pred_check
          %p288 = pneg %p103
        $region88: #{model_forward.1} parent=73 // pred_check_branch
          %290 = sbr.rel (%p288) target = $region90
        $region89: #{model_forward.1} parent=73 // pred_region
          %291 = dma.done [#allocation6], 64
        $region90: #{model_forward.1} parent=73 // pred_fallthru
          _
        // Predicated region
        $region91: #{model_forward.1} parent=73 // pred_check
          %p292 = pneg %p124
        $region92: #{model_forward.1} parent=73 // pred_check_branch
          %294 = sbr.rel (%p292) target = $region94
        $region93: #{model_forward.1} parent=73 // pred_region
          %295 = dma.done [#allocation9], 16
        $region94: #{model_forward.1} parent=73 // pred_fallthru
          _
        %296 = sfence
        %s297 = sand.u32 %s27, 1
        %s298 = sand.u32 %s27, 1
        %s299 = smul.addr %s298, 32
        %s300 = scalar_lea.vmem [#allocation2], %s299
        %p301 = pneg %p40
        %p302 = pneg %p37
        %p303 = pneg %p61
        %p304 = pneg %p58
        %p305 = pneg %p82
        %p306 = pneg %p79
        %p307 = pneg %p103
        %p308 = pneg %p100
        %p309 = pneg %p124
        %p310 = pneg %p121
        %p311 = pneg %p150
        %p312 = pneg %p147
        %s313 = sand.u32 %s137, 1
        %s314 = sand.u32 %s137, 1
        %s315 = smul.addr %s314, 64
        %s316 = scalar_lea.vmem [#allocation10], %s315
        %s317 = sld [smem:[#allocation3]]
        %s318 = sld [smem:[#allocation3 + $0x1]]
        %s319 = sld [smem:[#allocation3 + $0x80]]
        %s320 = sld [smem:[#allocation3 + $0x81]]
        %s321 = sld [smem:[#allocation3 + $0x100]]
        %s322 = sld [smem:[#allocation3 + $0x101]]
        %s323 = sld [smem:[#allocation5]]
        %s324 = sld [smem:[#allocation5 + $0x1]]
        %s325 = sld [smem:[#allocation5 + $0x2]]
        %s326 = sld [smem:[#allocation7]]
        %s327 = sld [smem:[#allocation7 + $0x1]]
        %s328 = sld [smem:[#allocation7 + $0x80]]
        %s329 = sld [smem:[#allocation7 + $0x81]]
        %s330 = sld [smem:[#allocation7 + $0x100]]
        %s331 = sld [smem:[#allocation7 + $0x101]]
        %s332 = sld [smem:[#allocation7 + $0x180]]
        %s333 = sld [smem:[#allocation7 + $0x181]]
        %s334 = sld [smem:[#allocation8]]
        %s335 = sld [smem:[#allocation8 + $0x1]]
        %s336 = sld [smem:[#allocation8 + $0x2]]
        %s337 = sld [smem:[#allocation8 + $0x3]]
        %v338 = vld [vmem:[%s276] sm:$0xff]
        %s339 = scalar_lea.vmem %s276, 8 [#allocation2]
        %v340 = vld [vmem:[%s339] sm:$0xff]
        %s341 = scalar_lea.vmem %s276, 16 [#allocation2]
        %v342 = vld [vmem:[%s341] sm:$0xff]
        %s343 = scalar_lea.vmem %s276, 24 [#allocation2]
        %v344 = vld [vmem:[%s343] sm:$0xff]
        %v345 = vstv %s317
        %v346 = vmul.f32 %v338, %v345
        %v347 = vstv %s318
        %v348 = vmul.f32 %v340, %v347
        %v349 = vadd.f32 %v346, %v348
        %v350 = vstv %s323
        %v351 = vadd.f32 %v349, %v350
        %v352 = vstv %s319
        %v353 = vmul.f32 %v338, %v352
        %v354 = vstv %s320
        %v355 = vmul.f32 %v340, %v354
        %v356 = vadd.f32 %v353, %v355
        %v357 = vstv %s324
        %v358 = vadd.f32 %v356, %v357
        %v359 = vstv %s321
        %v360 = vmul.f32 %v338, %v359
        %v361 = vstv %s322
        %v362 = vmul.f32 %v340, %v361
        %v363 = vadd.f32 %v360, %v362
        %v364 = vstv %s325
        %v365 = vadd.f32 %v363, %v364
        %v366 = vmul.f32 %v342, %v345
        %v367 = vmul.f32 %v344, %v347
        %v368 = vadd.f32 %v366, %v367
        %v369 = vadd.f32 %v368, %v350
        %v370 = vmul.f32 %v342, %v352
        %v371 = vmul.f32 %v344, %v354
        %v372 = vadd.f32 %v370, %v371
        %v373 = vadd.f32 %v372, %v357
        %v374 = vmul.f32 %v342, %v359
        %v375 = vmul.f32 %v344, %v361
        %v376 = vadd.f32 %v374, %v375
        %v377 = vadd.f32 %v376, %v364
        %v378 = vmax.f32 %v351, 0.0
        %v379 = vmax.f32 %v358, 0.0
        %v380 = vmax.f32 %v365, 0.0
        %v381 = vmax.f32 %v369, 0.0
        %v382 = vmax.f32 %v373, 0.0
        %v383 = vmax.f32 %v377, 0.0
        %v384 = vmul.f32 %v351, %v378
        %v385 = vmul.f32 %v358, %v379
        %v386 = vadd.f32 %v384, %v385
        %v387 = vmul.f32 %v365, %v380
        %v388 = vadd.f32 %v386, %v387
        %v389 = vmul.f32 %v351, %v381
        %v390 = vmul.f32 %v358, %v382
        %v391 = vadd.f32 %v389, %v390
        %v392 = vmul.f32 %v365, %v383
        %v393 = vadd.f32 %v391, %v392
        %v394 = vmul.f32 %v369, %v378
        %v395 = vmul.f32 %v373, %v379
        %v396 = vadd.f32 %v394, %v395
        %v397 = vmul.f32 %v377, %v380
        %v398 = vadd.f32 %v396, %v397
        %v399 = vmul.f32 %v369, %v381
        %v400 = vmul.f32 %v373, %v382
        %v401 = vadd.f32 %v399, %v400
        %v402 = vmul.f32 %v377, %v383
        %v403 = vadd.f32 %v401, %v402
        %v404 = vstv %s326
        %v405 = vmul.f32 %v388, %v404
        %v406 = vstv %s327
        %v407 = vmul.f32 %v393, %v406
        %v408 = vadd.f32 %v405, %v407
        %v409 = vstv %s334
        %v410 = vadd.f32 %v408, %v409
        %411 = vst [vmem:[%s316] sm:$0xff] %v410
        %v412 = vstv %s328
        %v413 = vmul.f32 %v388, %v412
        %v414 = vstv %s329
        %v415 = vmul.f32 %v393, %v414
        %v416 = vadd.f32 %v413, %v415
        %v417 = vstv %s335
        %v418 = vadd.f32 %v416, %v417
        %s419 = scalar_lea.vmem %s316, 8 [#allocation10]
        %420 = vst [vmem:[%s419] sm:$0xff] %v418
        %v421 = vstv %s330
        %v422 = vmul.f32 %v388, %v421
        %v423 = vstv %s331
        %v424 = vmul.f32 %v393, %v423
        %v425 = vadd.f32 %v422, %v424
        %v426 = vstv %s336
        %v427 = vadd.f32 %v425, %v426
        %s428 = scalar_lea.vmem %s316, 16 [#allocation10]
        %429 = vst [vmem:[%s428] sm:$0xff] %v427
        %v430 = vstv %s332
        %v431 = vmul.f32 %v388, %v430
        %v432 = vstv %s333
        %v433 = vmul.f32 %v393, %v432
        %v434 = vadd.f32 %v431, %v433
        %v435 = vstv %s337
        %v436 = vadd.f32 %v434, %v435
        %s437 = scalar_lea.vmem %s316, 24 [#allocation10]
        %438 = vst [vmem:[%s437] sm:$0xff] %v436
        %v439 = vmul.f32 %v398, %v404
        %v440 = vmul.f32 %v403, %v406
        %v441 = vadd.f32 %v439, %v440
        %v442 = vadd.f32 %v441, %v409
        %s443 = scalar_lea.vmem %s316, 32 [#allocation10]
        %444 = vst [vmem:[%s443] sm:$0xff] %v442
        %v445 = vmul.f32 %v398, %v412
        %v446 = vmul.f32 %v403, %v414
        %v447 = vadd.f32 %v445, %v446
        %v448 = vadd.f32 %v447, %v417
        %s449 = scalar_lea.vmem %s316, 40 [#allocation10]
        %450 = vst [vmem:[%s449] sm:$0xff] %v448
        %v451 = vmul.f32 %v398, %v421
        %v452 = vmul.f32 %v403, %v423
        %v453 = vadd.f32 %v451, %v452
        %v454 = vadd.f32 %v453, %v426
        %s455 = scalar_lea.vmem %s316, 48 [#allocation10]
        %456 = vst [vmem:[%s455] sm:$0xff] %v454
        %v457 = vmul.f32 %v398, %v430
        %v458 = vmul.f32 %v403, %v432
        %v459 = vadd.f32 %v457, %v458
        %v460 = vadd.f32 %v459, %v435
        %s461 = scalar_lea.vmem %s316, 56 [#allocation10]
        %462 = vst [vmem:[%s461] sm:$0xff] %v460
        %s463 = sand.u32 %s137, 1
        %s464 = sand.u32 %s137, 1
        %s465 = smul.addr %s464, 64
        %s466 = scalar_lea.vmem [#allocation10], %s465
        // Predicated region
        $region95: #{model_forward.1} parent=73 // pred_check
          %p467 = pneg %p147
        $region96: #{model_forward.1} parent=73 // pred_check_branch
          %469 = sbr.rel (%p467) target = $region98
        $region97: #{model_forward.1} parent=73 // pred_region
          %s470 = smul.addr %s19, 8
          %s471 = scalar_lea.vmem %s5, %s470
          // Predicated region
          $region99: #{model_forward.1} parent=97 // pred_check
            _
          $region100: #{model_forward.1} parent=97 // pred_check_branch
            %473 = sbr.rel (0) target = $region102
          $region101: #{model_forward.1} parent=97 // pred_region
            // Predicated region
            $region103: #{model_forward.1} parent=101 // pred_check
              _
            $region104: #{model_forward.1} parent=101 // pred_check_branch
              %475 = sbr.rel (0) target = $region106
            $region105: #{model_forward.1} parent=101 // pred_region
              // Predicated region
              $region118: #{model_forward.1} parent=105 // pred_check
                _
              $region119: #{model_forward.1} parent=105 // pred_check_branch
                %504 = sbr.rel (0) target = $region121
              $region120: #{model_forward.1} parent=105 // pred_region
                loop: start=0, step=1, limit=1
                $region122: #{model_forward.1} parent=120 // loop_pre_header
                  _
                $region123: #{model_forward.1} parent=120 // loop_header
                  %s506 = sphi 0, %s510
                  %p507 = scmp.ge.s32.totalorder %s506, 1
                  %s511 = sphi %s466, %s466
                  %s512 = sphi %s471, %s471
                $region124: #{model_forward.1} parent=120 // loop_header_branch
                  %509 = sbr.rel (%p507) target = $region128
                $region125: #{model_forward.1} parent=120 // loop_body
                  %v513 = vld [vmem:[%s511] sm:$0xff]
                  %514 = vst [vmem:[%s512] sm:$0xff] %v513
                  %v515 = vld [vmem:[%s511 + $0x8] sm:$0xff]
                  %516 = vst [vmem:[%s512 + $0x10] sm:$0xff] %v515
                  %v517 = vld [vmem:[%s511 + $0x10] sm:$0xff]
                  %518 = vst [vmem:[%s512 + $0x20] sm:$0xff] %v517
                  %v519 = vld [vmem:[%s511 + $0x18] sm:$0xff]
                  %520 = vst [vmem:[%s512 + $0x30] sm:$0xff] %v519
                  %v521 = vld [vmem:[%s511 + $0x20] sm:$0xff]
                  %522 = vst [vmem:[%s512 + $0x40] sm:$0xff] %v521
                  %v523 = vld [vmem:[%s511 + $0x28] sm:$0xff]
                  %524 = vst [vmem:[%s512 + $0x50] sm:$0xff] %v523
                  %v525 = vld [vmem:[%s511 + $0x30] sm:$0xff]
                  %526 = vst [vmem:[%s512 + $0x60] sm:$0xff] %v525
                  %v527 = vld [vmem:[%s511 + $0x38] sm:$0xff]
                  %528 = vst [vmem:[%s512 + $0x70] sm:$0xff] %v527
                $region126: #{model_forward.1} parent=120 // loop_footer
                  %s510 = sadd.s32 1, %s506
                $region127: #{model_forward.1} parent=120 // loop_footer_branch
                  %505 = sbr.rel target = $region123
                $region128: #{model_forward.1} parent=120 // loop_exit
                  _
              $region121: #{model_forward.1} parent=105 // pred_fallthru
                _
              // Predicated region
              $region129: #{model_forward.1} parent=105 // pred_check
                _
              $region130: #{model_forward.1} parent=105 // pred_check_branch
                %530 = sbr.rel target = $region132
              $region131: #{model_forward.1} parent=105 // pred_region
                _
              $region132: #{model_forward.1} parent=105 // pred_fallthru
                _
            $region106: #{model_forward.1} parent=101 // pred_fallthru
              _
            // Predicated region
            $region107: #{model_forward.1} parent=101 // pred_check
              _
            $region108: #{model_forward.1} parent=101 // pred_check_branch
              %477 = sbr.rel target = $region110
            $region109: #{model_forward.1} parent=101 // pred_region
              loop: start=0, step=1, limit=1
              $region111: #{model_forward.1} parent=109 // loop_pre_header
                _
              $region112: #{model_forward.1} parent=109 // loop_header
                %s480 = sphi 0, %s484
                %p481 = scmp.ge.s32.totalorder %s480, 1
                %s485 = sphi %s466, %s466
                %s486 = sphi %s471, %s471
              $region113: #{model_forward.1} parent=109 // loop_header_branch
                %483 = sbr.rel (%p481) target = $region117
              $region114: #{model_forward.1} parent=109 // loop_body
                %v487 = vld [vmem:[%s485] sm:$0xff]
                %488 = vst [vmem:[%s486] sm:$0xff] %v487
                %v489 = vld [vmem:[%s485 + $0x8] sm:$0xff]
                %490 = vst [vmem:[%s486 + $0x10] sm:$0xff] %v489
                %v491 = vld [vmem:[%s485 + $0x10] sm:$0xff]
                %492 = vst [vmem:[%s486 + $0x20] sm:$0xff] %v491
                %v493 = vld [vmem:[%s485 + $0x18] sm:$0xff]
                %494 = vst [vmem:[%s486 + $0x30] sm:$0xff] %v493
                %v495 = vld [vmem:[%s485 + $0x20] sm:$0xff]
                %496 = vst [vmem:[%s486 + $0x40] sm:$0xff] %v495
                %v497 = vld [vmem:[%s485 + $0x28] sm:$0xff]
                %498 = vst [vmem:[%s486 + $0x50] sm:$0xff] %v497
                %v499 = vld [vmem:[%s485 + $0x30] sm:$0xff]
                %500 = vst [vmem:[%s486 + $0x60] sm:$0xff] %v499
                %v501 = vld [vmem:[%s485 + $0x38] sm:$0xff]
                %502 = vst [vmem:[%s486 + $0x70] sm:$0xff] %v501
              $region115: #{model_forward.1} parent=109 // loop_footer
                %s484 = sadd.s32 1, %s480
              $region116: #{model_forward.1} parent=109 // loop_footer_branch
                %479 = sbr.rel target = $region112
              $region117: #{model_forward.1} parent=109 // loop_exit
                _
            $region110: #{model_forward.1} parent=101 // pred_fallthru
              _
          $region102: #{model_forward.1} parent=97 // pred_fallthru
            _
          %531 = vnop
        $region98: #{model_forward.1} parent=73 // pred_fallthru
          _
      $region74: #{model_forward.1} parent=5 // pred_fallthru
        _
      %p532 = scmp.le.s32.totalorder 2, %s14
      // Predicated region
      $region133: #{model_forward.1} parent=5 // pred_check
        %p533 = pneg %p532
      $region134: #{model_forward.1} parent=5 // pred_check_branch
        %535 = sbr.rel (%p533) target = $region136
      $region135: #{model_forward.1} parent=5 // pred_region
        %s536 = ssub.s32 %s14, 2
        // Predicated region
        $region137: #{model_forward.1} parent=135 // pred_check
          %p537 = pneg %p153
        $region138: #{model_forward.1} parent=135 // pred_check_branch
          %539 = sbr.rel (%p537) target = $region140
        $region139: #{model_forward.1} parent=135 // pred_region
          %s540 = sand.u32 %s138, 1
          %s541 = sand.u32 %s138, 1
          %s542 = smul.addr %s541, 64
          %s543 = scalar_lea.vmem [#allocation10], %s542
        $region140: #{model_forward.1} parent=135 // pred_fallthru
          _
      $region136: #{model_forward.1} parent=5 // pred_fallthru
        _
    $region6: #{model_forward.1} parent=1 // loop_footer
      %s18 = sadd.s32 1, %s14
    $region7: #{model_forward.1} parent=1 // loop_footer_branch
      %13 = sbr.rel target = $region3
    $region8: #{model_forward.1} parent=1 // loop_exit
      _
    %544 = vsyncpa [#allocation4], 1
    %s545 = scalar_lea.sflag [#allocation4], 1
    %546 = vsyncpa %s545, 1
    %547 = vsyncpa [#allocation6], 1
    %548 = vsyncpa [#allocation9], 1

</llo_original>
